<compile_context>
chip_gen: v7x
topology: tpu7x:2x2x1
jax: 0.10.0
libtpu: 0.0.40
codegen_flags: <defaults>
</compile_context>

<pallas_src>
import functools
import math

import jax
import jax.numpy as jnp
from jax.experimental import pallas as pl
from jax.experimental.pallas import tpu as pltpu


def _round_up(v, m):
    return (v + m - 1) // m * m


def _cdiv(a, b):
    return -(-a // b)


def _resblock_kernel(x_ref, w1_ref, b1_ref, w2_ref, b2_ref, mask_ref,
                     o_ref, col_ref, mid_ref, *, K, Wp, Lpad, s0, res_scale):
    """Fused ResBlock body for one batch element.

    x_ref   : (1, C, Lw)       zero-padded, spatially-flattened input (orig dtype)
    w*_ref  : (C, K*K*C)       tap-fused weight matrices (compute dtype)
    b*_ref  : (C, 1)           biases (f32)
    mask_ref: (1, Lpad)        1.0 on valid conv-output columns, 0.0 elsewhere
    o_ref   : (1, C, Lpad)     flattened output (valid values at m = y*Wp + x)
    col_ref : (K*K*C, Lpad)    VMEM im2row scratch (shift-stacked taps)
    mid_ref : (C, Lmid)        VMEM scratch: zero-padded ReLU'd intermediate
    """
    C = o_ref.shape[1]
    cdt = col_ref.dtype
    Lmid = mid_ref.shape[1]

    # ---- conv1: im2row (per-tap ref-sliced shifts) + ONE MXU matmul ----------
    for t in range(K * K):
        dy, dx = divmod(t, K)
        s = dy * Wp + dx
        col_ref[pl.ds(t * C, C), :] = x_ref[0, :, pl.ds(s, Lpad)].astype(cdt)
    a1 = jnp.dot(w1_ref[...], col_ref[...], preferred_element_type=jnp.float32)
    a1 = jnp.maximum(a1 + b1_ref[...], 0.0)                  # bias + ReLU (f32)

    # ---- rebuild the zero-padded, flattened intermediate for conv2 -----------
    # Only the small head/tail pad strips are zeroed; the interior window
    # [s0, s0+Lpad) is fully overwritten every step (masked columns written as
    # explicit zeros), so no full-plane zero store is needed.
    mid_ref[:, pl.ds(0, s0)] = jnp.zeros((C, s0), cdt)
    tail = Lmid - (s0 + Lpad)
    mid_ref[:, pl.ds(s0 + Lpad, tail)] = jnp.zeros((C, tail), cdt)
    mid_ref[:, pl.ds(s0, Lpad)] = (a1 * mask_ref[...]).astype(cdt)

    # ---- conv2: im2row from the padded intermediate + ONE MXU matmul ---------
    for t in range(K * K):
        dy, dx = divmod(t, K)
        s = dy * Wp + dx
        col_ref[pl.ds(t * C, C), :] = mid_ref[:, pl.ds(s, Lpad)]
    acc2 = jnp.dot(w2_ref[...], col_ref[...], preferred_element_type=jnp.float32)

    # ---- scale + residual (skip path taken from the original-precision x) ----
    res = (acc2 + b2_ref[...]) * res_scale + x_ref[0, :, pl.ds(s0, Lpad)]
    o_ref[0] = res.astype(o_ref.dtype)


def res_block(x, w1, b1, w2, b2, *, res_scale=1.0, compute_dtype=jnp.bfloat16):
    """ResBlock forward.  x: [B, C, H, W] (NCHW), w*: [Cout, Cin, K, K], b*: [C]."""
    B, C, H, W = x.shape
    Cout, Cin, K, K2 = w1.shape
    assert Cout == C and Cin == C and K == K2 and w2.shape == w1.shape
    p = K // 2
    Hp, Wp = H + 2 * p, W + 2 * p
    s0 = p * Wp + p                        # flat shift: unpadded -> padded coords
    s_max = 2 * p * Wp + 2 * p             # largest tap shift
    KKC = K * K * C
    Lpad = _round_up(H * Wp, 128)          # lane-dense matmul / output width
    # Enough whole padded rows so every tap slice [s, s+Lpad) is in-bounds.
    Hx = max(Hp, _cdiv(Lpad + s_max, Wp))
    Lw = Hx * Wp
    Lmid = _round_up(Lpad + s_max, 128)    # padded intermediate width

    # One pad (+ free reshape) builds the zero-padded, spatially-flattened input.
    xflat = jnp.pad(x, ((0, 0), (0, 0), (p, Hx - H - p), (p, p))).reshape(B, C, Lw)

    # Tap-fused weight matrices: w[co, t*C + ci] = W[co, ci, dy, dx], t = dy*K+dx.
    def _fuse(w):
        return jnp.transpose(w, (0, 2, 3, 1)).reshape(C, KKC).astype(compute_dtype)

    w1m, w2m = _fuse(w1), _fuse(w2)
    b1c = b1.reshape(C, 1).astype(jnp.float32)
    b2c = b2.reshape(C, 1).astype(jnp.float32)

    # Valid conv-output columns: m = y*Wp + x with y < H and x < W.
    m = jnp.arange(Lpad, dtype=jnp.int32)
    mask = ((m < H * Wp) & (m % Wp < W)).astype(jnp.float32).reshape(1, Lpad)

    kernel = functools.partial(_resblock_kernel, K=K, Wp=Wp, Lpad=Lpad,
                               s0=s0, res_scale=float(res_scale))

    cdt_size = jnp.dtype(compute_dtype).itemsize
    in_size = x.dtype.itemsize
    cost = pl.CostEstimate(
        flops=2 * B * (2 * H * W * KKC * C),
        transcendentals=0,
        bytes_accessed=(B * C * Lw * in_size              # input
                        + 2 * C * KKC * cdt_size          # weights
                        + B * C * Lpad * in_size))        # output

    # Rough per-step VMEM footprint (double-buffered blocks + scratches); used
    # to raise the scoped VMEM limit above the 16/32 MiB defaults with headroom.
    vmem_est = (2 * C * Lw * in_size + 2 * 2 * C * KKC * cdt_size
                + 2 * Lpad * 4 + 2 * C * Lpad * in_size
                + KKC * Lpad * cdt_size + C * Lmid * cdt_size)
    vmem_limit = int(min(100 * 2**20, max(32 * 2**20, 2 * vmem_est)))

    out_flat = pl.pallas_call(
        kernel,
        out_shape=jax.ShapeDtypeStruct((B, C, Lpad), x.dtype),
        grid_spec=pltpu.PrefetchScalarGridSpec(
            num_scalar_prefetch=0,
            grid=(B,),
            in_specs=[
                pl.BlockSpec((1, C, Lw), lambda b: (b, 0, 0)),     # x (flat, f32)
                pl.BlockSpec((C, KKC), lambda b: (0, 0)),          # w1 (tap-fused)
                pl.BlockSpec((C, 1), lambda b: (0, 0)),            # b1
                pl.BlockSpec((C, KKC), lambda b: (0, 0)),          # w2 (tap-fused)
                pl.BlockSpec((C, 1), lambda b: (0, 0)),            # b2
                pl.BlockSpec((1, Lpad), lambda b: (0, 0)),         # valid mask
            ],
            out_specs=pl.BlockSpec((1, C, Lpad), lambda b: (b, 0, 0)),
            scratch_shapes=[pltpu.VMEM((KKC, Lpad), compute_dtype),   # im2row
                            pltpu.VMEM((C, Lmid), compute_dtype)],    # padded mid
        ),
        compiler_params=pltpu.CompilerParams(
            dimension_semantics=("parallel",),
            vmem_limit_bytes=vmem_limit),
        cost_estimate=cost,
    )(xflat, w1m, b1c, w2m, b2c, mask)

    # Un-flatten: valid values sit at columns m = y*Wp + x with x < W.
    out = out_flat[:, :, :H * Wp].reshape(B, C, H, Wp)[:, :, :, :W]
    return out


if __name__ == "__main__":
    # Small deterministic test: batch=2, n_feat=4, 16x16 spatial, 3x3 convs.
    B, C, H, W, K = 2, 4, 16, 16, 3
    res_scale = 0.1

    key = jax.random.PRNGKey(0)
    kx, k1, k2, kb1, kb2 = jax.random.split(key, 5)
    bound = 1.0 / math.sqrt(C * K * K)      # PyTorch Conv2d default init range

    x = jax.random.normal(kx, (B, C, H, W), dtype=jnp.float32)
    w1 = jax.random.uniform(k1, (C, C, K, K), jnp.float32, -bound, bound)
    w2 = jax.random.uniform(k2, (C, C, K, K), jnp.float32, -bound, bound)
    b1 = jax.random.uniform(kb1, (C,), jnp.float32, -bound, bound)
    b2 = jax.random.uniform(kb2, (C,), jnp.float32, -bound, bound)

    # Pure-JAX reference (matches the PyTorch module).
    def conv2d(v, w, b):
        y = jax.lax.conv_general_dilated(
            v, w, window_strides=(1, 1), padding="SAME",
            dimension_numbers=("NCHW", "OIHW", "NCHW"))
        return y + b.reshape(1, -1, 1, 1)

    ref = conv2d(jax.nn.relu(conv2d(x, w1, b1)), w2, b2) * res_scale + x

    # f32 compute path: tight numeric check.
    out_f32 = jax.block_until_ready(
        res_block(x, w1, b1, w2, b2, res_scale=res_scale,
                  compute_dtype=jnp.float32))
    assert out_f32.shape == (B, C, H, W)
    assert jnp.allclose(out_f32, ref, atol=1e-4, rtol=1e-4), \
        float(jnp.max(jnp.abs(out_f32 - ref)))

    # bf16 compute path (native MXU dtype; residual stays f32): looser check.
    out_bf16 = jax.block_until_ready(
        res_block(x, w1, b1, w2, b2, res_scale=res_scale,
                  compute_dtype=jnp.bfloat16))
    assert out_bf16.shape == (B, C, H, W)
    assert jnp.allclose(out_bf16, ref, atol=3e-2, rtol=3e-2), \
        float(jnp.max(jnp.abs(out_bf16 - ref)))

    print("KERNEL_OK")
</pallas_src>

<mosaic_0001>
module attributes {stable_mosaic.version = 11 : i64} {
  func.func @_resblock_kernel(%arg0: i32, %arg1: memref<1x4x432xf32, #tpu.memory_space<vmem>>, %arg2: memref<4x36xf32, #tpu.memory_space<vmem>>, %arg3: memref<4x1xf32, #tpu.memory_space<vmem>>, %arg4: memref<4x36xf32, #tpu.memory_space<vmem>>, %arg5: memref<4x1xf32, #tpu.memory_space<vmem>>, %arg6: memref<1x384xf32, #tpu.memory_space<vmem>>, %arg7: memref<1x4x384xf32, #tpu.memory_space<vmem>>, %arg8: memref<36x384xf32, #tpu.memory_space<vmem>>, %arg9: memref<4x512xf32, #tpu.memory_space<vmem>>) attributes {dimension_semantics = [#tpu.dimension_semantics<parallel>], iteration_bounds = array<i64: 2>, scalar_prefetch = 0 : i64, scratch_operands = 2 : i64, tpu.core_type = #tpu.core_type<tc>, window_params = [{transform_indices = @transform_0, window_bounds = array<i64: 1, 4, 432>}, {pipeline_mode = #tpu.pipeline_mode<synchronous>, transform_indices = @transform_1, window_bounds = array<i64: 4, 36>}, {pipeline_mode = #tpu.pipeline_mode<synchronous>, transform_indices = @transform_2, window_bounds = array<i64: 4, 1>}, {pipeline_mode = #tpu.pipeline_mode<synchronous>, transform_indices = @transform_3, window_bounds = array<i64: 4, 36>}, {pipeline_mode = #tpu.pipeline_mode<synchronous>, transform_indices = @transform_4, window_bounds = array<i64: 4, 1>}, {pipeline_mode = #tpu.pipeline_mode<synchronous>, transform_indices = @transform_5, window_bounds = array<i64: 1, 384>}, {transform_indices = @transform_6, window_bounds = array<i64: 1, 4, 384>}]} {
    %c0 = arith.constant 0 : index
    %c0_0 = arith.constant 0 : index
    %c0_1 = arith.constant 0 : index
    %0 = vector.load %arg1[%c0, %c0_0, %c0_1] : memref<1x4x432xf32, #tpu.memory_space<vmem>>, vector<1x4x384xf32>
    %1 = vector.shape_cast %0 : vector<1x4x384xf32> to vector<4x384xf32>
    %c0_2 = arith.constant 0 : index
    %c0_3 = arith.constant 0 : index
    %2 = vector.load %arg8[%c0_2, %c0_3] : memref<36x384xf32, #tpu.memory_space<vmem>>, vector<4x384xf32>
    tpu.vector_store %arg8[%c0_2, %c0_3], %1 {strides = array<i32>} : memref<36x384xf32, #tpu.memory_space<vmem>>, vector<4x384xf32>,
    %c0_4 = arith.constant 0 : index
    %c0_5 = arith.constant 0 : index
    %c1 = arith.constant 1 : index
    %3 = vector.load %arg1[%c0_4, %c0_5, %c1] : memref<1x4x432xf32, #tpu.memory_space<vmem>>, vector<1x4x384xf32>
    %4 = vector.shape_cast %3 : vector<1x4x384xf32> to vector<4x384xf32>
    %c4 = arith.constant 4 : index
    %c0_6 = arith.constant 0 : index
    %5 = vector.load %arg8[%c4, %c0_6] : memref<36x384xf32, #tpu.memory_space<vmem>>, vector<4x384xf32>
    tpu.vector_store %arg8[%c4, %c0_6], %4 {strides = array<i32>} : memref<36x384xf32, #tpu.memory_space<vmem>>, vector<4x384xf32>,
    %c0_7 = arith.constant 0 : index
    %c0_8 = arith.constant 0 : index
    %c2 = arith.constant 2 : index
    %6 = vector.load %arg1[%c0_7, %c0_8, %c2] : memref<1x4x432xf32, #tpu.memory_space<vmem>>, vector<1x4x384xf32>
    %7 = vector.shape_cast %6 : vector<1x4x384xf32> to vector<4x384xf32>
    %c8 = arith.constant 8 : index
    %c0_9 = arith.constant 0 : index
    %8 = vector.load %arg8[%c8, %c0_9] : memref<36x384xf32, #tpu.memory_space<vmem>>, vector<4x384xf32>
    tpu.vector_store %arg8[%c8, %c0_9], %7 {strides = array<i32>} : memref<36x384xf32, #tpu.memory_space<vmem>>, vector<4x384xf32>,
    %c0_10 = arith.constant 0 : index
    %c0_11 = arith.constant 0 : index
    %c18 = arith.constant 18 : index
    %9 = vector.load %arg1[%c0_10, %c0_11, %c18] : memref<1x4x432xf32, #tpu.memory_space<vmem>>, vector<1x4x384xf32>
    %10 = vector.shape_cast %9 : vector<1x4x384xf32> to vector<4x384xf32>
    %c12 = arith.constant 12 : index
    %c0_12 = arith.constant 0 : index
    %11 = vector.load %arg8[%c12, %c0_12] : memref<36x384xf32, #tpu.memory_space<vmem>>, vector<4x384xf32>
    tpu.vector_store %arg8[%c12, %c0_12], %10 {strides = array<i32>} : memref<36x384xf32, #tpu.memory_space<vmem>>, vector<4x384xf32>,
    %c0_13 = arith.constant 0 : index
    %c0_14 = arith.constant 0 : index
    %c19 = arith.constant 19 : index
    %12 = vector.load %arg1[%c0_13, %c0_14, %c19] : memref<1x4x432xf32, #tpu.memory_space<vmem>>, vector<1x4x384xf32>
    %13 = vector.shape_cast %12 : vector<1x4x384xf32> to vector<4x384xf32>
    %c16 = arith.constant 16 : index
    %c0_15 = arith.constant 0 : index
    %14 = vector.load %arg8[%c16, %c0_15] : memref<36x384xf32, #tpu.memory_space<vmem>>, vector<4x384xf32>
    tpu.vector_store %arg8[%c16, %c0_15], %13 {strides = array<i32>} : memref<36x384xf32, #tpu.memory_space<vmem>>, vector<4x384xf32>,
    %c0_16 = arith.constant 0 : index
    %c0_17 = arith.constant 0 : index
    %c20 = arith.constant 20 : index
    %15 = vector.load %arg1[%c0_16, %c0_17, %c20] : memref<1x4x432xf32, #tpu.memory_space<vmem>>, vector<1x4x384xf32>
    %16 = vector.shape_cast %15 : vector<1x4x384xf32> to vector<4x384xf32>
    %c20_18 = arith.constant 20 : index
    %c0_19 = arith.constant 0 : index
    %17 = vector.load %arg8[%c20_18, %c0_19] : memref<36x384xf32, #tpu.memory_space<vmem>>, vector<4x384xf32>
    tpu.vector_store %arg8[%c20_18, %c0_19], %16 {strides = array<i32>} : memref<36x384xf32, #tpu.memory_space<vmem>>, vector<4x384xf32>,
    %c0_20 = arith.constant 0 : index
    %c0_21 = arith.constant 0 : index
    %c36 = arith.constant 36 : index
    %18 = vector.load %arg1[%c0_20, %c0_21, %c36] : memref<1x4x432xf32, #tpu.memory_space<vmem>>, vector<1x4x384xf32>
    %19 = vector.shape_cast %18 : vector<1x4x384xf32> to vector<4x384xf32>
    %c24 = arith.constant 24 : index
    %c0_22 = arith.constant 0 : index
    %20 = vector.load %arg8[%c24, %c0_22] : memref<36x384xf32, #tpu.memory_space<vmem>>, vector<4x384xf32>
    tpu.vector_store %arg8[%c24, %c0_22], %19 {strides = array<i32>} : memref<36x384xf32, #tpu.memory_space<vmem>>, vector<4x384xf32>,
    %c0_23 = arith.constant 0 : index
    %c0_24 = arith.constant 0 : index
    %c37 = arith.constant 37 : index
    %21 = vector.load %arg1[%c0_23, %c0_24, %c37] : memref<1x4x432xf32, #tpu.memory_space<vmem>>, vector<1x4x384xf32>
    %22 = vector.shape_cast %21 : vector<1x4x384xf32> to vector<4x384xf32>
    %c28 = arith.constant 28 : index
    %c0_25 = arith.constant 0 : index
    %23 = vector.load %arg8[%c28, %c0_25] : memref<36x384xf32, #tpu.memory_space<vmem>>, vector<4x384xf32>
    tpu.vector_store %arg8[%c28, %c0_25], %22 {strides = array<i32>} : memref<36x384xf32, #tpu.memory_space<vmem>>, vector<4x384xf32>,
    %c0_26 = arith.constant 0 : index
    %c0_27 = arith.constant 0 : index
    %c38 = arith.constant 38 : index
    %24 = vector.load %arg1[%c0_26, %c0_27, %c38] : memref<1x4x432xf32, #tpu.memory_space<vmem>>, vector<1x4x384xf32>
    %25 = vector.shape_cast %24 : vector<1x4x384xf32> to vector<4x384xf32>
    %c32 = arith.constant 32 : index
    %c0_28 = arith.constant 0 : index
    %26 = vector.load %arg8[%c32, %c0_28] : memref<36x384xf32, #tpu.memory_space<vmem>>, vector<4x384xf32>
    tpu.vector_store %arg8[%c32, %c0_28], %25 {strides = array<i32>} : memref<36x384xf32, #tpu.memory_space<vmem>>, vector<4x384xf32>,
    %c0_29 = arith.constant 0 : index
    %c0_30 = arith.constant 0 : index
    %27 = vector.load %arg2[%c0_29, %c0_30] : memref<4x36xf32, #tpu.memory_space<vmem>>, vector<4x36xf32>
    %c0_31 = arith.constant 0 : index
    %c0_32 = arith.constant 0 : index
    %28 = vector.load %arg8[%c0_31, %c0_32] : memref<36x384xf32, #tpu.memory_space<vmem>>, vector<36x384xf32>
    %cst = arith.constant dense<0.000000e+00> : vector<4x384xf32>
    %29 = tpu.matmul %27, %28, %cst {dimension_numbers = #tpu.dot_dimension_numbers<[1], [0], [0], [1], [0, 0, 1, 1], [], []>} : vector<4x36xf32>, vector<36x384xf32>, vector<4x384xf32> -> vector<4x384xf32>
    %c0_33 = arith.constant 0 : index
    %c0_34 = arith.constant 0 : index
    %30 = vector.load %arg3[%c0_33, %c0_34] : memref<4x1xf32, #tpu.memory_space<vmem>>, vector<4x1xf32>
    %31 = vector.broadcast %30 : vector<4x1xf32> to vector<4x384xf32>
    %32 = arith.addf %29, %31 : vector<4x384xf32>
    %cst_35 = arith.constant 0.000000e+00 : f32
    %33 = vector.broadcast %cst_35 : f32 to vector<4x384xf32>
    %34 = arith.maximumf %32, %33 : vector<4x384xf32>
    %cst_36 = arith.constant 0.000000e+00 : f32
    %35 = vector.broadcast %cst_36 : f32 to vector<4x19xf32>
    %c0_37 = arith.constant 0 : index
    %c0_38 = arith.constant 0 : index
    %36 = vector.load %arg9[%c0_37, %c0_38] : memref<4x512xf32, #tpu.memory_space<vmem>>, vector<4x19xf32>
    tpu.vector_store %arg9[%c0_37, %c0_38], %35 {strides = array<i32>} : memref<4x512xf32, #tpu.memory_space<vmem>>, vector<4x19xf32>,
    %cst_39 = arith.constant 0.000000e+00 : f32
    %37 = vector.broadcast %cst_39 : f32 to vector<4x109xf32>
    %c0_40 = arith.constant 0 : index
    %c403 = arith.constant 403 : index
    %38 = vector.load %arg9[%c0_40, %c403] : memref<4x512xf32, #tpu.memory_space<vmem>>, vector<4x109xf32>
    tpu.vector_store %arg9[%c0_40, %c403], %37 {strides = array<i32>} : memref<4x512xf32, #tpu.memory_space<vmem>>, vector<4x109xf32>,
    %c0_41 = arith.constant 0 : index
    %c0_42 = arith.constant 0 : index
    %39 = vector.load %arg6[%c0_41, %c0_42] : memref<1x384xf32, #tpu.memory_space<vmem>>, vector<1x384xf32>
    %40 = vector.broadcast %39 : vector<1x384xf32> to vector<4x384xf32>
    %41 = arith.mulf %34, %40 : vector<4x384xf32>
    %c0_43 = arith.constant 0 : index
    %c19_44 = arith.constant 19 : index
    %42 = vector.load %arg9[%c0_43, %c19_44] : memref<4x512xf32, #tpu.memory_space<vmem>>, vector<4x384xf32>
    tpu.vector_store %arg9[%c0_43, %c19_44], %41 {strides = array<i32>} : memref<4x512xf32, #tpu.memory_space<vmem>>, vector<4x384xf32>,
    %c0_45 = arith.constant 0 : index
    %c0_46 = arith.constant 0 : index
    %43 = vector.load %arg9[%c0_45, %c0_46] : memref<4x512xf32, #tpu.memory_space<vmem>>, vector<4x384xf32>
    %c0_47 = arith.constant 0 : index
    %c0_48 = arith.constant 0 : index
    %44 = vector.load %arg8[%c0_47, %c0_48] : memref<36x384xf32, #tpu.memory_space<vmem>>, vector<4x384xf32>
    tpu.vector_store %arg8[%c0_47, %c0_48], %43 {strides = array<i32>} : memref<36x384xf32, #tpu.memory_space<vmem>>, vector<4x384xf32>,
    %c0_49 = arith.constant 0 : index
    %c1_50 = arith.constant 1 : index
    %45 = vector.load %arg9[%c0_49, %c1_50] : memref<4x512xf32, #tpu.memory_space<vmem>>, vector<4x384xf32>
    %c4_51 = arith.constant 4 : index
    %c0_52 = arith.constant 0 : index
    %46 = vector.load %arg8[%c4_51, %c0_52] : memref<36x384xf32, #tpu.memory_space<vmem>>, vector<4x384xf32>
    tpu.vector_store %arg8[%c4_51, %c0_52], %45 {strides = array<i32>} : memref<36x384xf32, #tpu.memory_space<vmem>>, vector<4x384xf32>,
    %c0_53 = arith.constant 0 : index
    %c2_54 = arith.constant 2 : index
    %47 = vector.load %arg9[%c0_53, %c2_54] : memref<4x512xf32, #tpu.memory_space<vmem>>, vector<4x384xf32>
    %c8_55 = arith.constant 8 : index
    %c0_56 = arith.constant 0 : index
    %48 = vector.load %arg8[%c8_55, %c0_56] : memref<36x384xf32, #tpu.memory_space<vmem>>, vector<4x384xf32>
    tpu.vector_store %arg8[%c8_55, %c0_56], %47 {strides = array<i32>} : memref<36x384xf32, #tpu.memory_space<vmem>>, vector<4x384xf32>,
    %c0_57 = arith.constant 0 : index
    %c18_58 = arith.constant 18 : index
    %49 = vector.load %arg9[%c0_57, %c18_58] : memref<4x512xf32, #tpu.memory_space<vmem>>, vector<4x384xf32>
    %c12_59 = arith.constant 12 : index
    %c0_60 = arith.constant 0 : index
    %50 = vector.load %arg8[%c12_59, %c0_60] : memref<36x384xf32, #tpu.memory_space<vmem>>, vector<4x384xf32>
    tpu.vector_store %arg8[%c12_59, %c0_60], %49 {strides = array<i32>} : memref<36x384xf32, #tpu.memory_space<vmem>>, vector<4x384xf32>,
    %c0_61 = arith.constant 0 : index
    %c19_62 = arith.constant 19 : index
    %51 = vector.load %arg9[%c0_61, %c19_62] : memref<4x512xf32, #tpu.memory_space<vmem>>, vector<4x384xf32>
    %c16_63 = arith.constant 16 : index
    %c0_64 = arith.constant 0 : index
    %52 = vector.load %arg8[%c16_63, %c0_64] : memref<36x384xf32, #tpu.memory_space<vmem>>, vector<4x384xf32>
    tpu.vector_store %arg8[%c16_63, %c0_64], %51 {strides = array<i32>} : memref<36x384xf32, #tpu.memory_space<vmem>>, vector<4x384xf32>,
    %c0_65 = arith.constant 0 : index
    %c20_66 = arith.constant 20 : index
    %53 = vector.load %arg9[%c0_65, %c20_66] : memref<4x512xf32, #tpu.memory_space<vmem>>, vector<4x384xf32>
    %c20_67 = arith.constant 20 : index
    %c0_68 = arith.constant 0 : index
    %54 = vector.load %arg8[%c20_67, %c0_68] : memref<36x384xf32, #tpu.memory_space<vmem>>, vector<4x384xf32>
    tpu.vector_store %arg8[%c20_67, %c0_68], %53 {strides = array<i32>} : memref<36x384xf32, #tpu.memory_space<vmem>>, vector<4x384xf32>,
    %c0_69 = arith.constant 0 : index
    %c36_70 = arith.constant 36 : index
    %55 = vector.load %arg9[%c0_69, %c36_70] : memref<4x512xf32, #tpu.memory_space<vmem>>, vector<4x384xf32>
    %c24_71 = arith.constant 24 : index
    %c0_72 = arith.constant 0 : index
    %56 = vector.load %arg8[%c24_71, %c0_72] : memref<36x384xf32, #tpu.memory_space<vmem>>, vector<4x384xf32>
    tpu.vector_store %arg8[%c24_71, %c0_72], %55 {strides = array<i32>} : memref<36x384xf32, #tpu.memory_space<vmem>>, vector<4x384xf32>,
    %c0_73 = arith.constant 0 : index
    %c37_74 = arith.constant 37 : index
    %57 = vector.load %arg9[%c0_73, %c37_74] : memref<4x512xf32, #tpu.memory_space<vmem>>, vector<4x384xf32>
    %c28_75 = arith.constant 28 : index
    %c0_76 = arith.constant 0 : index
    %58 = vector.load %arg8[%c28_75, %c0_76] : memref<36x384xf32, #tpu.memory_space<vmem>>, vector<4x384xf32>
    tpu.vector_store %arg8[%c28_75, %c0_76], %57 {strides = array<i32>} : memref<36x384xf32, #tpu.memory_space<vmem>>, vector<4x384xf32>,
    %c0_77 = arith.constant 0 : index
    %c38_78 = arith.constant 38 : index
    %59 = vector.load %arg9[%c0_77, %c38_78] : memref<4x512xf32, #tpu.memory_space<vmem>>, vector<4x384xf32>
    %c32_79 = arith.constant 32 : index
    %c0_80 = arith.constant 0 : index
    %60 = vector.load %arg8[%c32_79, %c0_80] : memref<36x384xf32, #tpu.memory_space<vmem>>, vector<4x384xf32>
    tpu.vector_store %arg8[%c32_79, %c0_80], %59 {strides = array<i32>} : memref<36x384xf32, #tpu.memory_space<vmem>>, vector<4x384xf32>,
    %c0_81 = arith.constant 0 : index
    %c0_82 = arith.constant 0 : index
    %61 = vector.load %arg4[%c0_81, %c0_82] : memref<4x36xf32, #tpu.memory_space<vmem>>, vector<4x36xf32>
    %c0_83 = arith.constant 0 : index
    %c0_84 = arith.constant 0 : index
    %62 = vector.load %arg8[%c0_83, %c0_84] : memref<36x384xf32, #tpu.memory_space<vmem>>, vector<36x384xf32>
    %cst_85 = arith.constant dense<0.000000e+00> : vector<4x384xf32>
    %63 = tpu.matmul %61, %62, %cst_85 {dimension_numbers = #tpu.dot_dimension_numbers<[1], [0], [0], [1], [0, 0, 1, 1], [], []>} : vector<4x36xf32>, vector<36x384xf32>, vector<4x384xf32> -> vector<4x384xf32>
    %c0_86 = arith.constant 0 : index
    %c0_87 = arith.constant 0 : index
    %64 = vector.load %arg5[%c0_86, %c0_87] : memref<4x1xf32, #tpu.memory_space<vmem>>, vector<4x1xf32>
    %65 = vector.broadcast %64 : vector<4x1xf32> to vector<4x384xf32>
    %66 = arith.addf %63, %65 : vector<4x384xf32>
    %cst_88 = arith.constant 1.000000e-01 : f32
    %67 = vector.broadcast %cst_88 : f32 to vector<4x384xf32>
    %68 = arith.mulf %66, %67 : vector<4x384xf32>
    %c0_89 = arith.constant 0 : index
    %c0_90 = arith.constant 0 : index
    %c19_91 = arith.constant 19 : index
    %69 = vector.load %arg1[%c0_89, %c0_90, %c19_91] : memref<1x4x432xf32, #tpu.memory_space<vmem>>, vector<1x4x384xf32>
    %70 = vector.shape_cast %69 : vector<1x4x384xf32> to vector<4x384xf32>
    %71 = arith.addf %68, %70 : vector<4x384xf32>
    %c0_92 = arith.constant 0 : index
    %c0_93 = arith.constant 0 : index
    %c0_94 = arith.constant 0 : index
    %72 = vector.load %arg7[%c0_92, %c0_93, %c0_94] : memref<1x4x384xf32, #tpu.memory_space<vmem>>, vector<1x4x384xf32>
    %73 = vector.shape_cast %72 : vector<1x4x384xf32> to vector<4x384xf32>
    %74 = vector.shape_cast %71 : vector<4x384xf32> to vector<1x4x384xf32>
    tpu.vector_store %arg7[%c0_92, %c0_93, %c0_94], %74 {strides = array<i32>} : memref<1x4x384xf32, #tpu.memory_space<vmem>>, vector<1x4x384xf32>,
    return
  }
  func.func @transform_0(%arg0: i32) -> (i32, i32, i32) {
    %c0_i32 = arith.constant 0 : i32
    %c0_i32_0 = arith.constant 0 : i32
    %c0_i32_1 = arith.constant 0 : i32
    return %arg0, %c0_i32, %c0_i32_0 : i32, i32, i32
  }
  func.func @transform_1(%arg0: i32) -> (i32, i32) {
    %c0_i32 = arith.constant 0 : i32
    %c0_i32_0 = arith.constant 0 : i32
    %c0_i32_1 = arith.constant 0 : i32
    return %c0_i32, %c0_i32_0 : i32, i32
  }
  func.func @transform_2(%arg0: i32) -> (i32, i32) {
    %c0_i32 = arith.constant 0 : i32
    %c0_i32_0 = arith.constant 0 : i32
    %c0_i32_1 = arith.constant 0 : i32
    return %c0_i32, %c0_i32_0 : i32, i32
  }
  func.func @transform_3(%arg0: i32) -> (i32, i32) {
    %c0_i32 = arith.constant 0 : i32
    %c0_i32_0 = arith.constant 0 : i32
    %c0_i32_1 = arith.constant 0 : i32
    return %c0_i32, %c0_i32_0 : i32, i32
  }
  func.func @transform_4(%arg0: i32) -> (i32, i32) {
    %c0_i32 = arith.constant 0 : i32
    %c0_i32_0 = arith.constant 0 : i32
    %c0_i32_1 = arith.constant 0 : i32
    return %c0_i32, %c0_i32_0 : i32, i32
  }
  func.func @transform_5(%arg0: i32) -> (i32, i32) {
    %c0_i32 = arith.constant 0 : i32
    %c0_i32_0 = arith.constant 0 : i32
    %c0_i32_1 = arith.constant 0 : i32
    return %c0_i32, %c0_i32_0 : i32, i32
  }
  func.func @transform_6(%arg0: i32) -> (i32, i32, i32) {
    %c0_i32 = arith.constant 0 : i32
    %c0_i32_0 = arith.constant 0 : i32
    %c0_i32_1 = arith.constant 0 : i32
    return %arg0, %c0_i32, %c0_i32_0 : i32, i32, i32
  }
}

</mosaic_0001>

<llo_original>
// kernel: tpu_custom_call.1
$region0: #{tpu_custom_call.1}
  #allocation0 [shape = 'u32[]', space=smem, size = 0x4, offset = 0x4, fixed_abs, tag = 'smem constant byte address 0x4 - core index']
  #allocation1 [shape = 'u32[144,128]{1,0:T(1,128)}', space=vmem, size = 0x12000, scoped, tag = 'internal scratch']
  #allocation2 [shape = 'f32[36,384]{1,0:T(8,128)}', space=vmem, size = 0xf000, scoped, tag = 'scratch operand']
  #allocation3 [shape = 'f32[4,512]{1,0:T(4,128)}', space=vmem, size = 0x2000, scoped, tag = 'scratch operand']
  %s0 = inlined_call_operand.hbm [shape: f32[2,4,432], index: 0, kind: input, shape index: {}]
  %s1 = inlined_call_operand.vmem [shape: f32[4,36], index: 1, kind: input, shape index: {}]
  %s2 = inlined_call_operand.vmem [shape: f32[4,1], index: 2, kind: input, shape index: {}]
  %s3 = inlined_call_operand.vmem [shape: f32[4,36], index: 3, kind: input, shape index: {}]
  %s4 = inlined_call_operand.vmem [shape: f32[4,1], index: 4, kind: input, shape index: {}]
  %s5 = inlined_call_operand.vmem [shape: f32[1,384], index: 5, kind: input, shape index: {}]
  %s6 = inlined_call_operand.hbm [shape: f32[2,4,384], index: 6, kind: output, shape index: {}]
  %s7 = sld [smem:[#allocation0]]
  $region61: #{tpu_custom_call.1} parent=0
    _
  %s9 = ssub.s32 1, %s7
  %s10 = scalar_select 0, %s9, %s7
  $region1: #{tpu_custom_call.1} parent=0
    #allocation4 [shape = 'u8[16384]{0}', space=vmem, size = 0x4000, scoped, tag = 'input window, operand 0']
    #allocation5 [shape = 's32[2]{0}', space=sflag, size = 0x8, scoped, tag = 'scoped memory for tpu_custom_call.1']
    #allocation6 [shape = 's32[2]{0}', space=sflag, size = 0x8, scoped, tag = 'scoped memory for tpu_custom_call.1']
    #allocation7 [shape = 'u8[12288]{0}', space=vmem, size = 0x3000, scoped, tag = 'output window, operand 0']
    %11 = vsyncpa [#allocation5], 0
    %s12 = scalar_lea.sflag [#allocation5], 1
    %13 = vsyncpa %s12, 0
    %14 = vsyncpa [#allocation6], 0
    %s15 = scalar_lea.sflag [#allocation6], 1
    %16 = vsyncpa %s15, 0
    loop: start=0, step=1, limit=4
    $region2: #{tpu_custom_call.1} parent=1 // loop_pre_header
      _
    $region3: #{tpu_custom_call.1} parent=1 // loop_header
      %s18 = sphi 0, %s22
      %p19 = scmp.ge.s32.totalorder %s18, 4
      %s28 = sphi 0, %s30
      %s31 = sphi 0, %s28
      %s32 = sphi 0, %s31
      %s48 = sphi 0, %s32
      %s52 = sphi 0, %s52
      %s54 = sphi 0, %s52
      %s55 = sphi 0, %s54
      %s69 = sphi 0, %s55
      %s73 = sphi 0, %s73
      %s75 = sphi 0, %s73
      %s76 = sphi 0, %s75
      %s90 = sphi 0, %s76
      %s94 = sphi 0, %s94
      %s96 = sphi 0, %s94
      %s97 = sphi 0, %s96
      %s111 = sphi 0, %s97
      %s115 = sphi 0, %s115
      %s117 = sphi 0, %s115
      %s118 = sphi 0, %s117
      %s132 = sphi 0, %s118
      %s136 = sphi 0, %s136
      %s138 = sphi 0, %s136
      %s139 = sphi 0, %s138
      %s153 = sphi 0, %s139
      %s159 = sphi 0, %s161
      %s162 = sphi 0, %s159
      %s163 = sphi 0, %s162
      %s179 = sphi 0, %s163
    $region4: #{tpu_custom_call.1} parent=1 // loop_header_branch
      %21 = sbr.rel (%p19) target = $region8
    $region5: #{tpu_custom_call.1} parent=1 // loop_body
      %s23 = ssub.s32 %s18, 1
      %s24 = ssub.s32 %s18, 2
      %s25 = sadd.s32 %s18, 1
      %s26 = ssub.s32 %s18, %s25
      %p27 = scmp.eq.s32.totalorder %s26, 0
      %s29 = sadd.s32 %s28, 1
      %s30 = scalar_select %p27, %s28, %s29
      %p33 = pneg %p27
      %p34 = scmp.eq.s32.totalorder %s18, 1
      %p35 = por %p33, %p34
      %p36 = scmp.ne.s32.totalorder %s28, %s31
      %p37 = scmp.eq.s32.totalorder %s18, 0
      %p38 = por %p36, %p37
      %p39 = scmp.ne.s32.totalorder %s28, %s31
      %p40 = scmp.eq.s32.totalorder %s23, 1
      %p41 = por %p39, %p40
      %p42 = scmp.ne.s32.totalorder %s31, %s32
      %p43 = scmp.eq.s32.totalorder %s23, 0
      %p44 = por %p42, %p43
      %p45 = scmp.ne.s32.totalorder %s31, %s32
      %p46 = scmp.eq.s32.totalorder %s24, 1
      %p47 = por %p45, %p46
      %p49 = scmp.ne.s32.totalorder %s32, %s48
      %p50 = scmp.eq.s32.totalorder %s24, 0
      %p51 = por %p49, %p50
      %s53 = sadd.s32 %s52, 1
      %p56 = scmp.eq.s32.totalorder %s18, 1
      %p57 = scmp.ne.s32.totalorder %s52, %s54
      %p58 = scmp.eq.s32.totalorder %s18, 0
      %p59 = por %p57, %p58
      %p60 = scmp.ne.s32.totalorder %s52, %s54
      %p61 = scmp.eq.s32.totalorder %s23, 1
      %p62 = por %p60, %p61
      %p63 = scmp.ne.s32.totalorder %s54, %s55
      %p64 = scmp.eq.s32.totalorder %s23, 0
      %p65 = por %p63, %p64
      %p66 = scmp.ne.s32.totalorder %s54, %s55
      %p67 = scmp.eq.s32.totalorder %s24, 1
      %p68 = por %p66, %p67
      %p70 = scmp.ne.s32.totalorder %s55, %s69
      %p71 = scmp.eq.s32.totalorder %s24, 0
      %p72 = por %p70, %p71
      %s74 = sadd.s32 %s73, 1
      %p77 = scmp.eq.s32.totalorder %s18, 1
      %p78 = scmp.ne.s32.totalorder %s73, %s75
      %p79 = scmp.eq.s32.totalorder %s18, 0
      %p80 = por %p78, %p79
      %p81 = scmp.ne.s32.totalorder %s73, %s75
      %p82 = scmp.eq.s32.totalorder %s23, 1
      %p83 = por %p81, %p82
      %p84 = scmp.ne.s32.totalorder %s75, %s76
      %p85 = scmp.eq.s32.totalorder %s23, 0
      %p86 = por %p84, %p85
      %p87 = scmp.ne.s32.totalorder %s75, %s76
      %p88 = scmp.eq.s32.totalorder %s24, 1
      %p89 = por %p87, %p88
      %p91 = scmp.ne.s32.totalorder %s76, %s90
      %p92 = scmp.eq.s32.totalorder %s24, 0
      %p93 = por %p91, %p92
      %s95 = sadd.s32 %s94, 1
      %p98 = scmp.eq.s32.totalorder %s18, 1
      %p99 = scmp.ne.s32.totalorder %s94, %s96
      %p100 = scmp.eq.s32.totalorder %s18, 0
      %p101 = por %p99, %p100
      %p102 = scmp.ne.s32.totalorder %s94, %s96
      %p103 = scmp.eq.s32.totalorder %s23, 1
      %p104 = por %p102, %p103
      %p105 = scmp.ne.s32.totalorder %s96, %s97
      %p106 = scmp.eq.s32.totalorder %s23, 0
      %p107 = por %p105, %p106
      %p108 = scmp.ne.s32.totalorder %s96, %s97
      %p109 = scmp.eq.s32.totalorder %s24, 1
      %p110 = por %p108, %p109
      %p112 = scmp.ne.s32.totalorder %s97, %s111
      %p113 = scmp.eq.s32.totalorder %s24, 0
      %p114 = por %p112, %p113
      %s116 = sadd.s32 %s115, 1
      %p119 = scmp.eq.s32.totalorder %s18, 1
      %p120 = scmp.ne.s32.totalorder %s115, %s117
      %p121 = scmp.eq.s32.totalorder %s18, 0
      %p122 = por %p120, %p121
      %p123 = scmp.ne.s32.totalorder %s115, %s117
      %p124 = scmp.eq.s32.totalorder %s23, 1
      %p125 = por %p123, %p124
      %p126 = scmp.ne.s32.totalorder %s117, %s118
      %p127 = scmp.eq.s32.totalorder %s23, 0
      %p128 = por %p126, %p127
      %p129 = scmp.ne.s32.totalorder %s117, %s118
      %p130 = scmp.eq.s32.totalorder %s24, 1
      %p131 = por %p129, %p130
      %p133 = scmp.ne.s32.totalorder %s118, %s132
      %p134 = scmp.eq.s32.totalorder %s24, 0
      %p135 = por %p133, %p134
      %s137 = sadd.s32 %s136, 1
      %p140 = scmp.eq.s32.totalorder %s18, 1
      %p141 = scmp.ne.s32.totalorder %s136, %s138
      %p142 = scmp.eq.s32.totalorder %s18, 0
      %p143 = por %p141, %p142
      %p144 = scmp.ne.s32.totalorder %s136, %s138
      %p145 = scmp.eq.s32.totalorder %s23, 1
      %p146 = por %p144, %p145
      %p147 = scmp.ne.s32.totalorder %s138, %s139
      %p148 = scmp.eq.s32.totalorder %s23, 0
      %p149 = por %p147, %p148
      %p150 = scmp.ne.s32.totalorder %s138, %s139
      %p151 = scmp.eq.s32.totalorder %s24, 1
      %p152 = por %p150, %p151
      %p154 = scmp.ne.s32.totalorder %s139, %s153
      %p155 = scmp.eq.s32.totalorder %s24, 0
      %p156 = por %p154, %p155
      %s157 = ssub.s32 %s18, %s25
      %p158 = scmp.eq.s32.totalorder %s157, 0
      %s160 = sadd.s32 %s159, 1
      %s161 = scalar_select %p158, %s159, %s160
      %p164 = pneg %p158
      %p165 = scmp.eq.s32.totalorder %s18, 1
      %p166 = por %p164, %p165
      %p167 = scmp.ne.s32.totalorder %s159, %s162
      %p168 = scmp.eq.s32.totalorder %s18, 0
      %p169 = por %p167, %p168
      %p170 = scmp.ne.s32.totalorder %s159, %s162
      %p171 = scmp.eq.s32.totalorder %s23, 1
      %p172 = por %p170, %p171
      %p173 = scmp.ne.s32.totalorder %s162, %s163
      %p174 = scmp.eq.s32.totalorder %s23, 0
      %p175 = por %p173, %p174
      %p176 = scmp.ne.s32.totalorder %s162, %s163
      %p177 = scmp.eq.s32.totalorder %s24, 1
      %p178 = por %p176, %p177
      %p180 = scmp.ne.s32.totalorder %s163, %s179
      %p181 = scmp.eq.s32.totalorder %s24, 0
      %p182 = por %p180, %p181
      %p183 = scmp.le.s32.totalorder 1, %s18
      %p184 = scmp.lt.s32.totalorder %s18, 3
      %p185 = pnand %p183, %p184
      %p186 = pneg %p185
      // Predicated region
      $region9: #{tpu_custom_call.1} parent=5 // pred_check
        _
      $region10: #{tpu_custom_call.1} parent=5 // pred_check_branch
        %188 = sbr.rel (%p185) target = $region12
      $region11: #{tpu_custom_call.1} parent=5 // pred_region
        %s189 = ssub.s32 %s18, 1
        // Predicated region
        $region13: #{tpu_custom_call.1} parent=11 // pred_check
          %p190 = pneg %p65
        $region14: #{tpu_custom_call.1} parent=11 // pred_check_branch
          %192 = sbr.rel (%p190) target = $region16
        $region15: #{tpu_custom_call.1} parent=11 // pred_region
          _
        $region16: #{tpu_custom_call.1} parent=11 // pred_fallthru
          _
        // Predicated region
        $region17: #{tpu_custom_call.1} parent=11 // pred_check
          %p193 = pneg %p86
        $region18: #{tpu_custom_call.1} parent=11 // pred_check_branch
          %195 = sbr.rel (%p193) target = $region20
        $region19: #{tpu_custom_call.1} parent=11 // pred_region
          _
        $region20: #{tpu_custom_call.1} parent=11 // pred_fallthru
          _
        // Predicated region
        $region21: #{tpu_custom_call.1} parent=11 // pred_check
          %p196 = pneg %p107
        $region22: #{tpu_custom_call.1} parent=11 // pred_check_branch
          %198 = sbr.rel (%p196) target = $region24
        $region23: #{tpu_custom_call.1} parent=11 // pred_region
          _
        $region24: #{tpu_custom_call.1} parent=11 // pred_fallthru
          _
        // Predicated region
        $region25: #{tpu_custom_call.1} parent=11 // pred_check
          %p199 = pneg %p128
        $region26: #{tpu_custom_call.1} parent=11 // pred_check_branch
          %201 = sbr.rel (%p199) target = $region28
        $region27: #{tpu_custom_call.1} parent=11 // pred_region
          _
        $region28: #{tpu_custom_call.1} parent=11 // pred_fallthru
          _
        // Predicated region
        $region29: #{tpu_custom_call.1} parent=11 // pred_check
          %p202 = pneg %p149
        $region30: #{tpu_custom_call.1} parent=11 // pred_check_branch
          %204 = sbr.rel (%p202) target = $region32
        $region31: #{tpu_custom_call.1} parent=11 // pred_region
          _
        $region32: #{tpu_custom_call.1} parent=11 // pred_fallthru
          _
      $region12: #{tpu_custom_call.1} parent=5 // pred_fallthru
        _
      %p205 = scmp.lt.s32.totalorder %s18, 2
      // Predicated region
      $region33: #{tpu_custom_call.1} parent=5 // pred_check
        %p206 = pneg %p205
      $region34: #{tpu_custom_call.1} parent=5 // pred_check_branch
        %208 = sbr.rel (%p206) target = $region36
      $region35: #{tpu_custom_call.1} parent=5 // pred_region
        // Predicated region
        $region37: #{tpu_custom_call.1} parent=35 // pred_check
          %p209 = pneg %p38
        $region38: #{tpu_custom_call.1} parent=35 // pred_check_branch
          %211 = sbr.rel (%p209) target = $region40
        $region39: #{tpu_custom_call.1} parent=35 // pred_region
          %s212 = sand.u32 %s28, 1
          %s213 = scalar_lea.sflag [#allocation5], %s212
          %s214 = sand.u32 %s28, 1
          %s215 = smul.addr %s214, 16
          %s216 = scalar_lea.vmem [#allocation4], %s215
          %s218 = ssub.s32 256, 256
          %219 = vsyncadd %s213, %s218
          %s220 = smul.addr %s18, 4
          %s221 = smul.addr %s220, 64
          %s222 = scalar_lea.hbm %s0, %s221
          %s224 = sshll.u32 %s216, 4
          %s225 = int_to_ptr.vmem [resolvable:$true] %s224
          %227 = dma.hbm_to_vmem [thread:$0]  %s222, 256, %s225, %s213
        $region40: #{tpu_custom_call.1} parent=35 // pred_fallthru
          _
      $region36: #{tpu_custom_call.1} parent=5 // pred_fallthru
        _
      %p228 = scmp.le.s32.totalorder 1, %s18
      %p229 = scmp.lt.s32.totalorder %s18, 3
      %p230 = pnand %p228, %p229
      %p231 = pneg %p230
      // Predicated region
      $region41: #{tpu_custom_call.1} parent=5 // pred_check
        _
      $region42: #{tpu_custom_call.1} parent=5 // pred_check_branch
        %233 = sbr.rel (%p230) target = $region44
      $region43: #{tpu_custom_call.1} parent=5 // pred_region
        %s234 = ssub.s32 %s18, 1
        %s235 = sand.u32 %s31, 1
        %s236 = scalar_lea.sflag [#allocation5], %s235
        %s237 = sand.u32 %s31, 1
        %s238 = smul.addr %s237, 16
        %s239 = scalar_lea.vmem [#allocation4], %s238
        // Predicated region
        $region45: #{tpu_custom_call.1} parent=43 // pred_check
          %p240 = pneg %p44
        $region46: #{tpu_custom_call.1} parent=43 // pred_check_branch
          %242 = sbr.rel (%p240) target = $region48
        $region47: #{tpu_custom_call.1} parent=43 // pred_region
          %243 = dma.done %s236, 256
        $region48: #{tpu_custom_call.1} parent=43 // pred_fallthru
          _
        %s244 = sand.u32 %s31, 1
        %s245 = scalar_lea.sflag [#allocation5], %s244
        %s246 = sand.u32 %s31, 1
        %s247 = smul.addr %s246, 16
        %s248 = scalar_lea.vmem [#allocation4], %s247
        %p249 = pneg %p44
        %p250 = pneg %p41
        %p251 = pneg %p65
        %p252 = pneg %p62
        %p253 = pneg %p86
        %p254 = pneg %p83
        %p255 = pneg %p107
        %p256 = pneg %p104
        %p257 = pneg %p128
        %p258 = pneg %p125
        %p259 = pneg %p149
        %p260 = pneg %p146
        %p261 = pneg %p175
        %p262 = pneg %p172
        %s263 = sand.u32 %s162, 1
        %s264 = scalar_lea.sflag [#allocation6], %s263
        %s265 = sand.u32 %s162, 1
        %s266 = smul.addr %s265, 12
        %s267 = scalar_lea.vmem [#allocation7], %s266
        %v268 = vld [vmem:[%s239] sm:$0xff]
        %v269 = vld [vmem:[%s239 + $0x8] sm:$0xf]
        %v271 = vcombine.high %v268, %v268
        %273 = vst [vmem:[#allocation2] sm:$0xf] %v268
        %274 = vst [vmem:[#allocation2 + $0x8] sm:$0xf] %v271
        %275 = vst [vmem:[#allocation2 + $0x10] sm:$0xf] %v269
        %v276 = vld [vmem:[%s239] sm:$0xff]
        %v277 = vld [vmem:[%s239 + $0x8] sm:$0xff]
        %v280 = vcombine.low %v276, %v276
        %v281 = vcombine.low %v277, %v277
        %282 = vrot.lane.b32.xlu0 %v280, 127
        %v283 = vpop.permute.xlu0 %282
        %284 = vrot.lane.b32.xlu0 %v276, 127
        %v285 = vpop.permute.xlu0 %284
        %286 = vrot.lane.b32.xlu0 %v281, 127
        %v287 = vpop.permute.xlu0 %286
        %288 = vrot.lane.b32.xlu0 %v277, 127
        %v289 = vpop.permute.xlu0 %288
        %vm290 = vcmask 1039360
        %v291 = vsel %vm290, %v283, %v285
        %v292 = vsel %vm290, %v285, %v287
        %v293 = vsel %vm290, %v287, %v289
        %297 = vst [vmem:[#allocation2] sm:$0xf0] %v291
        %298 = vst [vmem:[#allocation2 + $0x8] sm:$0xf0] %v292
        %299 = vst [vmem:[#allocation2 + $0x10] sm:$0xf0] %v293
        %v300 = vld [vmem:[%s239] sm:$0xff]
        %v301 = vld [vmem:[%s239 + $0x8] sm:$0xff]
        %v304 = vcombine.high %v300, %v300
        %v305 = vcombine.high %v301, %v301
        %306 = vrot.lane.b32.xlu0 %v300, 126
        %v307 = vpop.permute.xlu0 %306
        %308 = vrot.lane.b32.xlu0 %v304, 126
        %v309 = vpop.permute.xlu0 %308
        %310 = vrot.lane.b32.xlu0 %v301, 126
        %v311 = vpop.permute.xlu0 %310
        %312 = vrot.lane.b32.xlu0 %v305, 126
        %v313 = vpop.permute.xlu0 %312
        %vm314 = vcmask 1031168
        %v315 = vsel %vm314, %v307, %v309
        %v316 = vsel %vm314, %v309, %v311
        %v317 = vsel %vm314, %v311, %v313
        %321 = vst [vmem:[#allocation2 + $0x18] sm:$0xf] %v315
        %322 = vst [vmem:[#allocation2 + $0x20] sm:$0xf] %v316
        %323 = vst [vmem:[#allocation2 + $0x28] sm:$0xf] %v317
        %v324 = vld [vmem:[%s239] sm:$0xff]
        %v325 = vld [vmem:[%s239 + $0x8] sm:$0xff]
        %v328 = vcombine.low %v324, %v324
        %v329 = vcombine.low %v325, %v325
        %330 = vrot.lane.b32.xlu0 %v328, 110
        %v331 = vpop.permute.xlu0 %330
        %332 = vrot.lane.b32.xlu0 %v324, 110
        %v333 = vpop.permute.xlu0 %332
        %334 = vrot.lane.b32.xlu0 %v329, 110
        %v335 = vpop.permute.xlu0 %334
        %336 = vrot.lane.b32.xlu0 %v325, 110
        %v337 = vpop.permute.xlu0 %336
        %vm338 = vcmask 900096
        %v339 = vsel %vm338, %v331, %v333
        %v340 = vsel %vm338, %v333, %v335
        %v341 = vsel %vm338, %v335, %v337
        %345 = vst [vmem:[#allocation2 + $0x18] sm:$0xf0] %v339
        %346 = vst [vmem:[#allocation2 + $0x20] sm:$0xf0] %v340
        %347 = vst [vmem:[#allocation2 + $0x28] sm:$0xf0] %v341
        %v348 = vld [vmem:[%s239] sm:$0xff]
        %v349 = vld [vmem:[%s239 + $0x8] sm:$0xff]
        %v352 = vcombine.high %v348, %v348
        %v353 = vcombine.high %v349, %v349
        %354 = vrot.lane.b32.xlu0 %v348, 109
        %v355 = vpop.permute.xlu0 %354
        %356 = vrot.lane.b32.xlu0 %v352, 109
        %v357 = vpop.permute.xlu0 %356
        %358 = vrot.lane.b32.xlu0 %v349, 109
        %v359 = vpop.permute.xlu0 %358
        %360 = vrot.lane.b32.xlu0 %v353, 109
        %v361 = vpop.permute.xlu0 %360
        %vm362 = vcmask 891904
        %v363 = vsel %vm362, %v355, %v357
        %v364 = vsel %vm362, %v357, %v359
        %v365 = vsel %vm362, %v359, %v361
        %369 = vst [vmem:[#allocation2 + $0x30] sm:$0xf] %v363
        %370 = vst [vmem:[#allocation2 + $0x38] sm:$0xf] %v364
        %371 = vst [vmem:[#allocation2 + $0x40] sm:$0xf] %v365
        %v372 = vld [vmem:[%s239] sm:$0xff]
        %v373 = vld [vmem:[%s239 + $0x8] sm:$0xff]
        %v376 = vcombine.low %v372, %v372
        %v377 = vcombine.low %v373, %v373
        %378 = vrot.lane.b32.xlu0 %v376, 108
        %v379 = vpop.permute.xlu0 %378
        %380 = vrot.lane.b32.xlu0 %v372, 108
        %v381 = vpop.permute.xlu0 %380
        %382 = vrot.lane.b32.xlu0 %v377, 108
        %v383 = vpop.permute.xlu0 %382
        %384 = vrot.lane.b32.xlu0 %v373, 108
        %v385 = vpop.permute.xlu0 %384
        %vm386 = vcmask 883712
        %v387 = vsel %vm386, %v379, %v381
        %v388 = vsel %vm386, %v381, %v383
        %v389 = vsel %vm386, %v383, %v385
        %393 = vst [vmem:[#allocation2 + $0x30] sm:$0xf0] %v387
        %394 = vst [vmem:[#allocation2 + $0x38] sm:$0xf0] %v388
        %395 = vst [vmem:[#allocation2 + $0x40] sm:$0xf0] %v389
        %v396 = vld [vmem:[%s239] sm:$0xff]
        %v397 = vld [vmem:[%s239 + $0x8] sm:$0xff]
        %v400 = vcombine.high %v396, %v396
        %v401 = vcombine.high %v397, %v397
        %402 = vrot.lane.b32.xlu0 %v396, 92
        %v403 = vpop.permute.xlu0 %402
        %404 = vrot.lane.b32.xlu0 %v400, 92
        %v405 = vpop.permute.xlu0 %404
        %406 = vrot.lane.b32.xlu0 %v397, 92
        %v407 = vpop.permute.xlu0 %406
        %408 = vrot.lane.b32.xlu0 %v401, 92
        %v409 = vpop.permute.xlu0 %408
        %vm410 = vcmask 752640
        %v411 = vsel %vm410, %v403, %v405
        %v412 = vsel %vm410, %v405, %v407
        %v413 = vsel %vm410, %v407, %v409
        %417 = vst [vmem:[#allocation2 + $0x48] sm:$0xf] %v411
        %418 = vst [vmem:[#allocation2 + $0x50] sm:$0xf] %v412
        %419 = vst [vmem:[#allocation2 + $0x58] sm:$0xf] %v413
        %v420 = vld [vmem:[%s239] sm:$0xff]
        %v421 = vld [vmem:[%s239 + $0x8] sm:$0xff]
        %v424 = vcombine.low %v420, %v420
        %v425 = vcombine.low %v421, %v421
        %426 = vrot.lane.b32.xlu0 %v424, 91
        %v427 = vpop.permute.xlu0 %426
        %428 = vrot.lane.b32.xlu0 %v420, 91
        %v429 = vpop.permute.xlu0 %428
        %430 = vrot.lane.b32.xlu0 %v425, 91
        %v431 = vpop.permute.xlu0 %430
        %432 = vrot.lane.b32.xlu0 %v421, 91
        %v433 = vpop.permute.xlu0 %432
        %vm434 = vcmask 744448
        %v435 = vsel %vm434, %v427, %v429
        %v436 = vsel %vm434, %v429, %v431
        %v437 = vsel %vm434, %v431, %v433
        %441 = vst [vmem:[#allocation2 + $0x48] sm:$0xf0] %v435
        %442 = vst [vmem:[#allocation2 + $0x50] sm:$0xf0] %v436
        %443 = vst [vmem:[#allocation2 + $0x58] sm:$0xf0] %v437
        %v444 = vld [vmem:[%s239] sm:$0xff]
        %v445 = vld [vmem:[%s239 + $0x8] sm:$0xff]
        %v448 = vcombine.high %v444, %v444
        %v449 = vcombine.high %v445, %v445
        %450 = vrot.lane.b32.xlu0 %v444, 90
        %v451 = vpop.permute.xlu0 %450
        %452 = vrot.lane.b32.xlu0 %v448, 90
        %v453 = vpop.permute.xlu0 %452
        %454 = vrot.lane.b32.xlu0 %v445, 90
        %v455 = vpop.permute.xlu0 %454
        %456 = vrot.lane.b32.xlu0 %v449, 90
        %v457 = vpop.permute.xlu0 %456
        %vm458 = vcmask 736256
        %v459 = vsel %vm458, %v451, %v453
        %v460 = vsel %vm458, %v453, %v455
        %v461 = vsel %vm458, %v455, %v457
        %465 = vst [vmem:[#allocation2 + $0x60] sm:$0xf] %v459
        %466 = vst [vmem:[#allocation2 + $0x68] sm:$0xf] %v460
        %467 = vst [vmem:[#allocation2 + $0x70] sm:$0xf] %v461
        %v468 = vld [vmem:[%s1] sm:$0xf]
        %v469 = vld [vmem:[#allocation2] sm:$0xff]
        %v470 = vld [vmem:[#allocation2 + $0x8] sm:$0xff]
        %v471 = vld [vmem:[#allocation2 + $0x10] sm:$0xff]
        %v472 = vld [vmem:[#allocation2 + $0x18] sm:$0xff]
        %v473 = vld [vmem:[#allocation2 + $0x20] sm:$0xff]
        %v474 = vld [vmem:[#allocation2 + $0x28] sm:$0xff]
        %v475 = vld [vmem:[#allocation2 + $0x30] sm:$0xff]
        %v476 = vld [vmem:[#allocation2 + $0x38] sm:$0xff]
        %v477 = vld [vmem:[#allocation2 + $0x40] sm:$0xff]
        %v478 = vld [vmem:[#allocation2 + $0x48] sm:$0xff]
        %v479 = vld [vmem:[#allocation2 + $0x50] sm:$0xff]
        %v480 = vld [vmem:[#allocation2 + $0x58] sm:$0xff]
        %v481 = vld [vmem:[#allocation2 + $0x60] sm:$0xf]
        %v482 = vld [vmem:[#allocation2 + $0x68] sm:$0xf]
        %v483 = vld [vmem:[#allocation2 + $0x70] sm:$0xf]
        %v484 = vld [vmem:[%s2] sm:$0xf]
        %486 = vset.pattern.permute.xlu0 0
        %487 = vperm.xlu0 %486, %v484
        %v488 = vpop.permute.xlu0 %487
        %vm490 = vcmask 293888
        %v492 = vsel %vm490, %v468, 0
        %vm494 = vcmask 1043456
        %v496 = vsel %vm494, %v481, 0
        %v499 = vsel %vm494, %v482, 0
        %v502 = vsel %vm494, %v483, 0
        %504 = vmatprep.subr.mxu0 %v470
        %505 = vmatpush1.msra.mxu0 %v469
        %506 = vmatprep.subr.mxu0 %v473
        %507 = vmatpush1.msra.mxu0 %v472
        %508 = vmatprep.subr.mxu0 %v476
        %509 = vmatpush1.msra.mxu0 %v475
        %510 = vmatprep.subr.mxu0 %v479
        %511 = vmatpush1.msra.mxu0 %v478
        %512 = vmatprep.subr.mxu0 %v499
        %513 = vmatpush1.msra.mxu0 %v496
        %514 = vmatprep.subr.mxu0 0.0
        %515 = vmatpush1.msra.mxu0 0.0
        %516 = vmatprep.subr.mxu0 0.0
        %517 = vmatpush1.msra.mxu0 0.0
        %518 = vmatprep.subr.mxu0 0.0
        %519 = vmatpush1.msra.mxu0 0.0
        %520 = vmatprep.subr.mxu0 0.0
        %521 = vmatpush1.msra.mxu0 0.0
        %522 = vmatprep.subr.mxu0 0.0
        %523 = vmatpush1.msra.mxu0 0.0
        %524 = vmatprep.subr.mxu0 0.0
        %525 = vmatpush1.msra.mxu0 0.0
        %526 = vmatprep.subr.mxu0 0.0
        %527 = vmatpush1.msra.mxu0 0.0
        %528 = vmatprep.subr.mxu0 0.0
        %529 = vmatpush1.msra.mxu0 0.0
        %530 = vmatprep.subr.mxu0 0.0
        %531 = vmatpush1.msra.mxu0 0.0
        %532 = vmatprep.subr.mxu0 0.0
        %533 = vmatpush1.msra.mxu0 0.0
        %534 = vmatprep.subr.mxu0 0.0
        %535 = vmatpush1.msra.mxu0 0.0
        %536 = vmatprep.subr.mxu0 0.0
        %537 = vmatpush1.msra.mxu0 0.0
        %538 = vmatprep.subr.mxu0 0.0
        %539 = vmatpush1.msra.mxu0 0.0
        %540 = vmatprep.subr.mxu0 0.0
        %541 = vmatpush1.msra.mxu0 0.0
        %542 = vmatprep.subr.mxu0 0.0
        %543 = vmatpush1.msra.mxu0 0.0
        %544 = vmatprep.subr.mxu0 0.0
        %545 = vmatpush1.msra.mxu0 0.0
        %546 = vmatprep.subr.mxu0 0.0
        %547 = vmatpush1.msra.mxu0 0.0
        %548 = vmatprep.subr.mxu0 0.0
        %549 = vmatpush1.msra.mxu0 0.0
        %550 = vmatprep.subr.mxu0 0.0
        %551 = vmatpush1.msra.mxu0 0.0
        %552 = vmatprep.subr.mxu0 0.0
        %553 = vmatpush1.msra.mxu0 0.0
        %554 = vmatprep.subr.mxu0 0.0
        %555 = vmatpush1.msra.mxu0 0.0
        %556 = vmatprep.subr.mxu0 0.0
        %557 = vmatpush1.msra.mxu0 0.0
        %558 = vmatprep.subr.mxu0 0.0
        %559 = vmatpush1.msra.mxu0 0.0
        %560 = vmatprep.subr.mxu0 0.0
        %561 = vmatpush1.msra.mxu0 0.0
        %562 = vmatprep.subr.mxu0 0.0
        %563 = vmatpush1.msra.mxu0 0.0
        %564 = vmatprep.subr.mxu0 0.0
        %565 = vmatpush1.msra.mxu0 0.0
        %566 = vmatprep.subr.mxu0 0.0
        %567 = vmatpush1.msra.mxu0 0.0
        %568 = vmatprep.mubr.f32.mxu0 0.0
        %569 = vmatmul.mubr.f32.gmra.mrb[0].mxu0 %v492
        %v570 = vpop.f32.mrb[0].mxu0
        %v571 = vadd.f32 %v488, %v570
        %v572 = vpop.f32.mrb[0].mxu0
        %v573 = vadd.f32 %v488, %v572
        %574 = vdwg.mxu0
        %575 = vmatprep.subr.mxu0 0.0
        %576 = vmatpush1.msra.mxu0 %v471
        %577 = vmatprep.subr.mxu0 0.0
        %578 = vmatpush1.msra.mxu0 %v474
        %579 = vmatprep.subr.mxu0 0.0
        %580 = vmatpush1.msra.mxu0 %v477
        %581 = vmatprep.subr.mxu0 0.0
        %582 = vmatpush1.msra.mxu0 %v480
        %583 = vmatprep.subr.mxu0 0.0
        %584 = vmatpush1.msra.mxu0 %v502
        %585 = vmatprep.subr.mxu0 0.0
        %586 = vmatpush1.msra.mxu0 0.0
        %587 = vmatprep.subr.mxu0 0.0
        %588 = vmatpush1.msra.mxu0 0.0
        %589 = vmatprep.subr.mxu0 0.0
        %590 = vmatpush1.msra.mxu0 0.0
        %591 = vmatprep.subr.mxu0 0.0
        %592 = vmatpush1.msra.mxu0 0.0
        %593 = vmatprep.subr.mxu0 0.0
        %594 = vmatpush1.msra.mxu0 0.0
        %595 = vmatprep.subr.mxu0 0.0
        %596 = vmatpush1.msra.mxu0 0.0
        %597 = vmatprep.subr.mxu0 0.0
        %598 = vmatpush1.msra.mxu0 0.0
        %599 = vmatprep.subr.mxu0 0.0
        %600 = vmatpush1.msra.mxu0 0.0
        %601 = vmatprep.subr.mxu0 0.0
        %602 = vmatpush1.msra.mxu0 0.0
        %603 = vmatprep.subr.mxu0 0.0
        %604 = vmatpush1.msra.mxu0 0.0
        %605 = vmatprep.subr.mxu0 0.0
        %606 = vmatpush1.msra.mxu0 0.0
        %607 = vmatprep.subr.mxu0 0.0
        %608 = vmatpush1.msra.mxu0 0.0
        %609 = vmatprep.subr.mxu0 0.0
        %610 = vmatpush1.msra.mxu0 0.0
        %611 = vmatprep.subr.mxu0 0.0
        %612 = vmatpush1.msra.mxu0 0.0
        %613 = vmatprep.subr.mxu0 0.0
        %614 = vmatpush1.msra.mxu0 0.0
        %615 = vmatprep.subr.mxu0 0.0
        %616 = vmatpush1.msra.mxu0 0.0
        %617 = vmatprep.subr.mxu0 0.0
        %618 = vmatpush1.msra.mxu0 0.0
        %619 = vmatprep.subr.mxu0 0.0
        %620 = vmatpush1.msra.mxu0 0.0
        %621 = vmatprep.subr.mxu0 0.0
        %622 = vmatpush1.msra.mxu0 0.0
        %623 = vmatprep.subr.mxu0 0.0
        %624 = vmatpush1.msra.mxu0 0.0
        %625 = vmatprep.subr.mxu0 0.0
        %626 = vmatpush1.msra.mxu0 0.0
        %627 = vmatprep.subr.mxu0 0.0
        %628 = vmatpush1.msra.mxu0 0.0
        %629 = vmatprep.subr.mxu0 0.0
        %630 = vmatpush1.msra.mxu0 0.0
        %631 = vmatprep.subr.mxu0 0.0
        %632 = vmatpush1.msra.mxu0 0.0
        %633 = vmatprep.subr.mxu0 0.0
        %634 = vmatpush1.msra.mxu0 0.0
        %635 = vmatprep.subr.mxu0 0.0
        %636 = vmatpush1.msra.mxu0 0.0
        %637 = vmatprep.subr.mxu0 0.0
        %638 = vmatpush1.msra.mxu0 0.0
        %639 = vmatprep.mubr.f32.mxu0 0.0
        %640 = vmatmul.mubr.f32.gmra.mrb[0].mxu0 %v492
        %v641 = vpop.f32.mrb[0].mxu0
        %v642 = vadd.f32 %v488, %v641
        %v643 = vpop.f32.mrb[0].mxu0
        %644 = vdwg.mxu0
        %v645 = vmax.f32 %v571, 0.0
        %v646 = vmax.f32 %v573, 0.0
        %v647 = vmax.f32 %v642, 0.0
        %vm648 = vcmask 150528
        %649 = vst.msk [vmem:[#allocation3] sm:$0xf] %vm648, 0.0
        %vm650 = vcmask 1043608
        %651 = vst.msk [vmem:[#allocation3 + $0xc] sm:$0xf] %vm650, 0.0
        %v652 = vld [vmem:[%s5] sm:$0x7]
        %v654 = vlaneseq
        %v655 = vshrl.u32 %v654, 7
        %v656 = vsub.s32 0, %v655
        %v657 = vrot.slane %v652, %v656
        %v658 = vlaneseq
        %v659 = vshrl.u32 %v658, 7
        %v660 = vsub.s32 1, %v659
        %v661 = vrot.slane %v652, %v660
        %v662 = vlaneseq
        %v663 = vshrl.u32 %v662, 7
        %v664 = vsub.s32 2, %v663
        %v665 = vrot.slane %v652, %v664
        %v669 = vmul.f32 %v645, %v657
        %v670 = vmul.f32 %v646, %v661
        %v671 = vmul.f32 %v647, %v665
        %v675 = vcombine.low %v669, %v670
        %676 = vrot.lane.b32.xlu0 %v675, 19
        %v677 = vpop.permute.xlu0 %676
        %678 = vrot.lane.b32.xlu0 %v671, 19
        %v679 = vpop.permute.xlu0 %678
        %v680 = vrot.slane %v677, 4
        %v681 = vrot.slane %v679, 4
        %vm682 = vcmask 154624
        %v683 = vsel %vm682, %v680, %v677
        %v684 = vsel %vm494, %v680, %v681
        %v685 = vsel %vm682, %v684, %v679
        %vm688 = vcmask 1047556
        %vm689 = vmor %vm688, %vm650
        %690 = vst.msk [vmem:[#allocation3] sm:$0xff] %vm689, %v683
        %vm691 = vcmask 154628
        %vm692 = vmor %vm691, %vm494
        %693 = vst.msk [vmem:[#allocation3 + $0x8] sm:$0xff] %vm692, %v685
        %v694 = vld [vmem:[#allocation3] sm:$0xff]
        %v695 = vld [vmem:[#allocation3 + $0x8] sm:$0xf]
        %v697 = vcombine.high %v694, %v694
        %699 = vst [vmem:[#allocation2] sm:$0xf] %v694
        %700 = vst [vmem:[#allocation2 + $0x8] sm:$0xf] %v697
        %701 = vst [vmem:[#allocation2 + $0x10] sm:$0xf] %v695
        %v702 = vld [vmem:[#allocation3] sm:$0xff]
        %v703 = vld [vmem:[#allocation3 + $0x8] sm:$0xff]
        %v706 = vcombine.low %v702, %v702
        %v707 = vcombine.low %v703, %v703
        %708 = vrot.lane.b32.xlu0 %v706, 127
        %v709 = vpop.permute.xlu0 %708
        %710 = vrot.lane.b32.xlu0 %v702, 127
        %v711 = vpop.permute.xlu0 %710
        %712 = vrot.lane.b32.xlu0 %v707, 127
        %v713 = vpop.permute.xlu0 %712
        %714 = vrot.lane.b32.xlu0 %v703, 127
        %v715 = vpop.permute.xlu0 %714
        %v716 = vsel %vm290, %v709, %v711
        %v717 = vsel %vm290, %v711, %v713
        %v718 = vsel %vm290, %v713, %v715
        %722 = vst [vmem:[#allocation2] sm:$0xf0] %v716
        %723 = vst [vmem:[#allocation2 + $0x8] sm:$0xf0] %v717
        %724 = vst [vmem:[#allocation2 + $0x10] sm:$0xf0] %v718
        %v725 = vld [vmem:[#allocation3] sm:$0xff]
        %v726 = vld [vmem:[#allocation3 + $0x8] sm:$0xff]
        %v729 = vcombine.high %v725, %v725
        %v730 = vcombine.high %v726, %v726
        %731 = vrot.lane.b32.xlu0 %v725, 126
        %v732 = vpop.permute.xlu0 %731
        %733 = vrot.lane.b32.xlu0 %v729, 126
        %v734 = vpop.permute.xlu0 %733
        %735 = vrot.lane.b32.xlu0 %v726, 126
        %v736 = vpop.permute.xlu0 %735
        %737 = vrot.lane.b32.xlu0 %v730, 126
        %v738 = vpop.permute.xlu0 %737
        %v739 = vsel %vm314, %v732, %v734
        %v740 = vsel %vm314, %v734, %v736
        %v741 = vsel %vm314, %v736, %v738
        %745 = vst [vmem:[#allocation2 + $0x18] sm:$0xf] %v739
        %746 = vst [vmem:[#allocation2 + $0x20] sm:$0xf] %v740
        %747 = vst [vmem:[#allocation2 + $0x28] sm:$0xf] %v741
        %v748 = vld [vmem:[#allocation3] sm:$0xff]
        %v749 = vld [vmem:[#allocation3 + $0x8] sm:$0xff]
        %v752 = vcombine.low %v748, %v748
        %v753 = vcombine.low %v749, %v749
        %754 = vrot.lane.b32.xlu0 %v752, 110
        %v755 = vpop.permute.xlu0 %754
        %756 = vrot.lane.b32.xlu0 %v748, 110
        %v757 = vpop.permute.xlu0 %756
        %758 = vrot.lane.b32.xlu0 %v753, 110
        %v759 = vpop.permute.xlu0 %758
        %760 = vrot.lane.b32.xlu0 %v749, 110
        %v761 = vpop.permute.xlu0 %760
        %v762 = vsel %vm338, %v755, %v757
        %v763 = vsel %vm338, %v757, %v759
        %v764 = vsel %vm338, %v759, %v761
        %768 = vst [vmem:[#allocation2 + $0x18] sm:$0xf0] %v762
        %769 = vst [vmem:[#allocation2 + $0x20] sm:$0xf0] %v763
        %770 = vst [vmem:[#allocation2 + $0x28] sm:$0xf0] %v764
        %v771 = vld [vmem:[#allocation3] sm:$0xff]
        %v772 = vld [vmem:[#allocation3 + $0x8] sm:$0xff]
        %v775 = vcombine.high %v771, %v771
        %v776 = vcombine.high %v772, %v772
        %777 = vrot.lane.b32.xlu0 %v771, 109
        %v778 = vpop.permute.xlu0 %777
        %779 = vrot.lane.b32.xlu0 %v775, 109
        %v780 = vpop.permute.xlu0 %779
        %781 = vrot.lane.b32.xlu0 %v772, 109
        %v782 = vpop.permute.xlu0 %781
        %783 = vrot.lane.b32.xlu0 %v776, 109
        %v784 = vpop.permute.xlu0 %783
        %v785 = vsel %vm362, %v778, %v780
        %v786 = vsel %vm362, %v780, %v782
        %v787 = vsel %vm362, %v782, %v784
        %791 = vst [vmem:[#allocation2 + $0x30] sm:$0xf] %v785
        %792 = vst [vmem:[#allocation2 + $0x38] sm:$0xf] %v786
        %793 = vst [vmem:[#allocation2 + $0x40] sm:$0xf] %v787
        %v794 = vld [vmem:[#allocation3] sm:$0xff]
        %v795 = vld [vmem:[#allocation3 + $0x8] sm:$0xff]
        %v798 = vcombine.low %v794, %v794
        %v799 = vcombine.low %v795, %v795
        %800 = vrot.lane.b32.xlu0 %v798, 108
        %v801 = vpop.permute.xlu0 %800
        %802 = vrot.lane.b32.xlu0 %v794, 108
        %v803 = vpop.permute.xlu0 %802
        %804 = vrot.lane.b32.xlu0 %v799, 108
        %v805 = vpop.permute.xlu0 %804
        %806 = vrot.lane.b32.xlu0 %v795, 108
        %v807 = vpop.permute.xlu0 %806
        %v808 = vsel %vm386, %v801, %v803
        %v809 = vsel %vm386, %v803, %v805
        %v810 = vsel %vm386, %v805, %v807
        %814 = vst [vmem:[#allocation2 + $0x30] sm:$0xf0] %v808
        %815 = vst [vmem:[#allocation2 + $0x38] sm:$0xf0] %v809
        %816 = vst [vmem:[#allocation2 + $0x40] sm:$0xf0] %v810
        %v817 = vld [vmem:[#allocation3] sm:$0xff]
        %v818 = vld [vmem:[#allocation3 + $0x8] sm:$0xff]
        %v821 = vcombine.high %v817, %v817
        %v822 = vcombine.high %v818, %v818
        %823 = vrot.lane.b32.xlu0 %v817, 92
        %v824 = vpop.permute.xlu0 %823
        %825 = vrot.lane.b32.xlu0 %v821, 92
        %v826 = vpop.permute.xlu0 %825
        %827 = vrot.lane.b32.xlu0 %v818, 92
        %v828 = vpop.permute.xlu0 %827
        %829 = vrot.lane.b32.xlu0 %v822, 92
        %v830 = vpop.permute.xlu0 %829
        %v831 = vsel %vm410, %v824, %v826
        %v832 = vsel %vm410, %v826, %v828
        %v833 = vsel %vm410, %v828, %v830
        %837 = vst [vmem:[#allocation2 + $0x48] sm:$0xf] %v831
        %838 = vst [vmem:[#allocation2 + $0x50] sm:$0xf] %v832
        %839 = vst [vmem:[#allocation2 + $0x58] sm:$0xf] %v833
        %v840 = vld [vmem:[#allocation3] sm:$0xff]
        %v841 = vld [vmem:[#allocation3 + $0x8] sm:$0xff]
        %v844 = vcombine.low %v840, %v840
        %v845 = vcombine.low %v841, %v841
        %846 = vrot.lane.b32.xlu0 %v844, 91
        %v847 = vpop.permute.xlu0 %846
        %848 = vrot.lane.b32.xlu0 %v840, 91
        %v849 = vpop.permute.xlu0 %848
        %850 = vrot.lane.b32.xlu0 %v845, 91
        %v851 = vpop.permute.xlu0 %850
        %852 = vrot.lane.b32.xlu0 %v841, 91
        %v853 = vpop.permute.xlu0 %852
        %v854 = vsel %vm434, %v847, %v849
        %v855 = vsel %vm434, %v849, %v851
        %v856 = vsel %vm434, %v851, %v853
        %860 = vst [vmem:[#allocation2 + $0x48] sm:$0xf0] %v854
        %861 = vst [vmem:[#allocation2 + $0x50] sm:$0xf0] %v855
        %862 = vst [vmem:[#allocation2 + $0x58] sm:$0xf0] %v856
        %v863 = vld [vmem:[#allocation3] sm:$0xff]
        %v864 = vld [vmem:[#allocation3 + $0x8] sm:$0xff]
        %v867 = vcombine.high %v863, %v863
        %v868 = vcombine.high %v864, %v864
        %869 = vrot.lane.b32.xlu0 %v863, 90
        %v870 = vpop.permute.xlu0 %869
        %871 = vrot.lane.b32.xlu0 %v867, 90
        %v872 = vpop.permute.xlu0 %871
        %873 = vrot.lane.b32.xlu0 %v864, 90
        %v874 = vpop.permute.xlu0 %873
        %875 = vrot.lane.b32.xlu0 %v868, 90
        %v876 = vpop.permute.xlu0 %875
        %v877 = vsel %vm458, %v870, %v872
        %v878 = vsel %vm458, %v872, %v874
        %v879 = vsel %vm458, %v874, %v876
        %883 = vst [vmem:[#allocation2 + $0x60] sm:$0xf] %v877
        %884 = vst [vmem:[#allocation2 + $0x68] sm:$0xf] %v878
        %885 = vst [vmem:[#allocation2 + $0x70] sm:$0xf] %v879
        %v886 = vld [vmem:[%s3] sm:$0xf]
        %v887 = vld [vmem:[#allocation2] sm:$0xff]
        %v888 = vld [vmem:[#allocation2 + $0x8] sm:$0xff]
        %v889 = vld [vmem:[#allocation2 + $0x10] sm:$0xff]
        %v890 = vld [vmem:[#allocation2 + $0x18] sm:$0xff]
        %v891 = vld [vmem:[#allocation2 + $0x20] sm:$0xff]
        %v892 = vld [vmem:[#allocation2 + $0x28] sm:$0xff]
        %v893 = vld [vmem:[#allocation2 + $0x30] sm:$0xff]
        %v894 = vld [vmem:[#allocation2 + $0x38] sm:$0xff]
        %v895 = vld [vmem:[#allocation2 + $0x40] sm:$0xff]
        %v896 = vld [vmem:[#allocation2 + $0x48] sm:$0xff]
        %v897 = vld [vmem:[#allocation2 + $0x50] sm:$0xff]
        %v898 = vld [vmem:[#allocation2 + $0x58] sm:$0xff]
        %v899 = vld [vmem:[#allocation2 + $0x60] sm:$0xf]
        %v900 = vld [vmem:[#allocation2 + $0x68] sm:$0xf]
        %v901 = vld [vmem:[#allocation2 + $0x70] sm:$0xf]
        %v902 = vld [vmem:[%s4] sm:$0xf]
        %904 = vset.pattern.permute.xlu0 0
        %905 = vperm.xlu0 %904, %v902
        %v906 = vpop.permute.xlu0 %905
        %v909 = vsel %vm490, %v886, 0
        %v912 = vsel %vm494, %v899, 0
        %v915 = vsel %vm494, %v900, 0
        %v918 = vsel %vm494, %v901, 0
        %920 = vmatprep.subr.mxu0 %v888
        %921 = vmatpush1.msra.mxu0 %v887
        %922 = vmatprep.subr.mxu0 %v891
        %923 = vmatpush1.msra.mxu0 %v890
        %924 = vmatprep.subr.mxu0 %v894
        %925 = vmatpush1.msra.mxu0 %v893
        %926 = vmatprep.subr.mxu0 %v897
        %927 = vmatpush1.msra.mxu0 %v896
        %928 = vmatprep.subr.mxu0 %v915
        %929 = vmatpush1.msra.mxu0 %v912
        %930 = vmatprep.subr.mxu0 0.0
        %931 = vmatpush1.msra.mxu0 0.0
        %932 = vmatprep.subr.mxu0 0.0
        %933 = vmatpush1.msra.mxu0 0.0
        %934 = vmatprep.subr.mxu0 0.0
        %935 = vmatpush1.msra.mxu0 0.0
        %936 = vmatprep.subr.mxu0 0.0
        %937 = vmatpush1.msra.mxu0 0.0
        %938 = vmatprep.subr.mxu0 0.0
        %939 = vmatpush1.msra.mxu0 0.0
        %940 = vmatprep.subr.mxu0 0.0
        %941 = vmatpush1.msra.mxu0 0.0
        %942 = vmatprep.subr.mxu0 0.0
        %943 = vmatpush1.msra.mxu0 0.0
        %944 = vmatprep.subr.mxu0 0.0
        %945 = vmatpush1.msra.mxu0 0.0
        %946 = vmatprep.subr.mxu0 0.0
        %947 = vmatpush1.msra.mxu0 0.0
        %948 = vmatprep.subr.mxu0 0.0
        %949 = vmatpush1.msra.mxu0 0.0
        %950 = vmatprep.subr.mxu0 0.0
        %951 = vmatpush1.msra.mxu0 0.0
        %952 = vmatprep.subr.mxu0 0.0
        %953 = vmatpush1.msra.mxu0 0.0
        %954 = vmatprep.subr.mxu0 0.0
        %955 = vmatpush1.msra.mxu0 0.0
        %956 = vmatprep.subr.mxu0 0.0
        %957 = vmatpush1.msra.mxu0 0.0
        %958 = vmatprep.subr.mxu0 0.0
        %959 = vmatpush1.msra.mxu0 0.0
        %960 = vmatprep.subr.mxu0 0.0
        %961 = vmatpush1.msra.mxu0 0.0
        %962 = vmatprep.subr.mxu0 0.0
        %963 = vmatpush1.msra.mxu0 0.0
        %964 = vmatprep.subr.mxu0 0.0
        %965 = vmatpush1.msra.mxu0 0.0
        %966 = vmatprep.subr.mxu0 0.0
        %967 = vmatpush1.msra.mxu0 0.0
        %968 = vmatprep.subr.mxu0 0.0
        %969 = vmatpush1.msra.mxu0 0.0
        %970 = vmatprep.subr.mxu0 0.0
        %971 = vmatpush1.msra.mxu0 0.0
        %972 = vmatprep.subr.mxu0 0.0
        %973 = vmatpush1.msra.mxu0 0.0
        %974 = vmatprep.subr.mxu0 0.0
        %975 = vmatpush1.msra.mxu0 0.0
        %976 = vmatprep.subr.mxu0 0.0
        %977 = vmatpush1.msra.mxu0 0.0
        %978 = vmatprep.subr.mxu0 0.0
        %979 = vmatpush1.msra.mxu0 0.0
        %980 = vmatprep.subr.mxu0 0.0
        %981 = vmatpush1.msra.mxu0 0.0
        %982 = vmatprep.subr.mxu0 0.0
        %983 = vmatpush1.msra.mxu0 0.0
        %984 = vmatprep.mubr.f32.mxu0 0.0
        %985 = vmatmul.mubr.f32.gmra.mrb[0].mxu0 %v909
        %v986 = vpop.f32.mrb[0].mxu0
        %v987 = vadd.f32 %v906, %v986
        %v988 = vpop.f32.mrb[0].mxu0
        %v989 = vadd.f32 %v906, %v988
        %990 = vdwg.mxu0
        %991 = vmatprep.subr.mxu0 0.0
        %992 = vmatpush1.msra.mxu0 %v889
        %993 = vmatprep.subr.mxu0 0.0
        %994 = vmatpush1.msra.mxu0 %v892
        %995 = vmatprep.subr.mxu0 0.0
        %996 = vmatpush1.msra.mxu0 %v895
        %997 = vmatprep.subr.mxu0 0.0
        %998 = vmatpush1.msra.mxu0 %v898
        %999 = vmatprep.subr.mxu0 0.0
        %1000 = vmatpush1.msra.mxu0 %v918
        %1001 = vmatprep.subr.mxu0 0.0
        %1002 = vmatpush1.msra.mxu0 0.0
        %1003 = vmatprep.subr.mxu0 0.0
        %1004 = vmatpush1.msra.mxu0 0.0
        %1005 = vmatprep.subr.mxu0 0.0
        %1006 = vmatpush1.msra.mxu0 0.0
        %1007 = vmatprep.subr.mxu0 0.0
        %1008 = vmatpush1.msra.mxu0 0.0
        %1009 = vmatprep.subr.mxu0 0.0
        %1010 = vmatpush1.msra.mxu0 0.0
        %1011 = vmatprep.subr.mxu0 0.0
        %1012 = vmatpush1.msra.mxu0 0.0
        %1013 = vmatprep.subr.mxu0 0.0
        %1014 = vmatpush1.msra.mxu0 0.0
        %1015 = vmatprep.subr.mxu0 0.0
        %1016 = vmatpush1.msra.mxu0 0.0
        %1017 = vmatprep.subr.mxu0 0.0
        %1018 = vmatpush1.msra.mxu0 0.0
        %1019 = vmatprep.subr.mxu0 0.0
        %1020 = vmatpush1.msra.mxu0 0.0
        %1021 = vmatprep.subr.mxu0 0.0
        %1022 = vmatpush1.msra.mxu0 0.0
        %1023 = vmatprep.subr.mxu0 0.0
        %1024 = vmatpush1.msra.mxu0 0.0
        %1025 = vmatprep.subr.mxu0 0.0
        %1026 = vmatpush1.msra.mxu0 0.0
        %1027 = vmatprep.subr.mxu0 0.0
        %1028 = vmatpush1.msra.mxu0 0.0
        %1029 = vmatprep.subr.mxu0 0.0
        %1030 = vmatpush1.msra.mxu0 0.0
        %1031 = vmatprep.subr.mxu0 0.0
        %1032 = vmatpush1.msra.mxu0 0.0
        %1033 = vmatprep.subr.mxu0 0.0
        %1034 = vmatpush1.msra.mxu0 0.0
        %1035 = vmatprep.subr.mxu0 0.0
        %1036 = vmatpush1.msra.mxu0 0.0
        %1037 = vmatprep.subr.mxu0 0.0
        %1038 = vmatpush1.msra.mxu0 0.0
        %1039 = vmatprep.subr.mxu0 0.0
        %1040 = vmatpush1.msra.mxu0 0.0
        %1041 = vmatprep.subr.mxu0 0.0
        %1042 = vmatpush1.msra.mxu0 0.0
        %1043 = vmatprep.subr.mxu0 0.0
        %1044 = vmatpush1.msra.mxu0 0.0
        %1045 = vmatprep.subr.mxu0 0.0
        %1046 = vmatpush1.msra.mxu0 0.0
        %1047 = vmatprep.subr.mxu0 0.0
        %1048 = vmatpush1.msra.mxu0 0.0
        %1049 = vmatprep.subr.mxu0 0.0
        %1050 = vmatpush1.msra.mxu0 0.0
        %1051 = vmatprep.subr.mxu0 0.0
        %1052 = vmatpush1.msra.mxu0 0.0
        %1053 = vmatprep.subr.mxu0 0.0
        %1054 = vmatpush1.msra.mxu0 0.0
        %1055 = vmatprep.mubr.f32.mxu0 0.0
        %1056 = vmatmul.mubr.f32.gmra.mrb[0].mxu0 %v909
        %v1057 = vpop.f32.mrb[0].mxu0
        %v1058 = vadd.f32 %v906, %v1057
        %v1059 = vpop.f32.mrb[0].mxu0
        %1060 = vdwg.mxu0
        %v1061 = vmul.f32 %v987, 0.1
        %v1062 = vmul.f32 %v989, 0.1
        %v1063 = vmul.f32 %v1058, 0.1
        %v1064 = vld [vmem:[%s239] sm:$0xff]
        %v1065 = vld [vmem:[%s239 + $0x8] sm:$0xff]
        %v1068 = vcombine.high %v1064, %v1064
        %v1069 = vcombine.high %v1065, %v1065
        %1070 = vrot.lane.b32.xlu0 %v1064, 109
        %v1071 = vpop.permute.xlu0 %1070
        %1072 = vrot.lane.b32.xlu0 %v1068, 109
        %v1073 = vpop.permute.xlu0 %1072
        %1074 = vrot.lane.b32.xlu0 %v1065, 109
        %v1075 = vpop.permute.xlu0 %1074
        %1076 = vrot.lane.b32.xlu0 %v1069, 109
        %v1077 = vpop.permute.xlu0 %1076
        %v1078 = vsel %vm362, %v1071, %v1073
        %v1079 = vsel %vm362, %v1073, %v1075
        %v1080 = vsel %vm362, %v1075, %v1077
        %v1084 = vadd.f32 %v1061, %v1078
        %v1085 = vadd.f32 %v1062, %v1079
        %v1086 = vadd.f32 %v1063, %v1080
        %v1089 = vcombine.low %v1084, %v1085
        %1091 = vst [vmem:[%s267] sm:$0xff] %v1089
        %1092 = vst [vmem:[%s267 + $0x8] sm:$0xf] %v1086
        %s1093 = sand.u32 %s162, 1
        %s1094 = scalar_lea.sflag [#allocation6], %s1093
        %s1095 = sand.u32 %s162, 1
        %s1096 = smul.addr %s1095, 12
        %s1097 = scalar_lea.vmem [#allocation7], %s1096
        // Predicated region
        $region49: #{tpu_custom_call.1} parent=43 // pred_check
          %p1098 = pneg %p172
        $region50: #{tpu_custom_call.1} parent=43 // pred_check_branch
          %1100 = sbr.rel (%p1098) target = $region52
        $region51: #{tpu_custom_call.1} parent=43 // pred_region
          %s1102 = ssub.s32 192, 192
          %1103 = vsyncadd %s1094, %s1102
          %s1104 = smul.addr %s23, 3
          %s1105 = smul.addr %s1104, 64
          %s1106 = scalar_lea.hbm %s6, %s1105
          %s1108 = sshll.u32 %s1097, 4
          %s1109 = int_to_ptr.vmem [resolvable:$true] %s1108
          %1111 = dma.vmem_to_hbm [thread:$0]  %s1109, 192, %s1106, %s1094
        $region52: #{tpu_custom_call.1} parent=43 // pred_fallthru
          _
      $region44: #{tpu_custom_call.1} parent=5 // pred_fallthru
        _
      %p1112 = scmp.le.s32.totalorder 2, %s18
      // Predicated region
      $region53: #{tpu_custom_call.1} parent=5 // pred_check
        %p1113 = pneg %p1112
      $region54: #{tpu_custom_call.1} parent=5 // pred_check_branch
        %1115 = sbr.rel (%p1113) target = $region56
      $region55: #{tpu_custom_call.1} parent=5 // pred_region
        %s1116 = ssub.s32 %s18, 2
        // Predicated region
        $region57: #{tpu_custom_call.1} parent=55 // pred_check
          %p1117 = pneg %p178
        $region58: #{tpu_custom_call.1} parent=55 // pred_check_branch
          %1119 = sbr.rel (%p1117) target = $region60
        $region59: #{tpu_custom_call.1} parent=55 // pred_region
          %s1120 = sand.u32 %s163, 1
          %s1121 = scalar_lea.sflag [#allocation6], %s1120
          %s1122 = sand.u32 %s163, 1
          %s1123 = smul.addr %s1122, 12
          %s1124 = scalar_lea.vmem [#allocation7], %s1123
          %1125 = dma.done %s1121, 192
        $region60: #{tpu_custom_call.1} parent=55 // pred_fallthru
          _
      $region56: #{tpu_custom_call.1} parent=5 // pred_fallthru
        _
    $region6: #{tpu_custom_call.1} parent=1 // loop_footer
      %s22 = sadd.s32 1, %s18
    $region7: #{tpu_custom_call.1} parent=1 // loop_footer_branch
      %17 = sbr.rel target = $region3
    $region8: #{tpu_custom_call.1} parent=1 // loop_exit
      _
    %1126 = vsyncpa [#allocation5], 1
    %s1127 = scalar_lea.sflag [#allocation5], 1
    %1128 = vsyncpa %s1127, 1
    %1129 = vsyncpa [#allocation6], 1
    %s1130 = scalar_lea.sflag [#allocation6], 1
    %1131 = vsyncpa %s1130, 1

</llo_original>
